<compile_context>
chip_gen: v5e
topology: v5e:2x2
jax: 0.10.0
libtpu: 0.0.40
codegen_flags: <defaults>
</compile_context>

<pallas_src>
import math

import jax
import jax.numpy as jnp
from jax.experimental import pallas as pl
from jax.experimental.pallas import tpu as pltpu

_LOG_2PI = math.log(2.0 * math.pi)


def _gaussian_prior_kernel(z_ref, mean_ref, std_ref, inv_std_ref, eps_ref, c_ref,
                           logp_ref, sample_ref):
    """One batch tile of Independent(Normal(mean, std), 1).log_prob and rsample.

    z_ref:       [TB, M]  (native dtype) points to evaluate the log-density at
    mean_ref:    [1, M]   f32 prior mean
    std_ref:     [1, M]   f32 prior stddev
    inv_std_ref: [1, M]   f32 precomputed 1/std
    eps_ref:     [TB, M]  (native dtype) standard-normal noise
    c_ref:       [1, 1]   f32 constant  -(sum(log std) + 0.5*M*log(2*pi))
    logp_ref:    [TB, 1]  f32 per-row log-prob (event dim summed out)
    sample_ref:  [TB, M]  mean + std * eps
    """
    f32 = jnp.float32
    z = z_ref[...].astype(f32)
    eps = eps_ref[...].astype(f32)
    mean = mean_ref[...]
    std = std_ref[...]
    inv_std = inv_std_ref[...]

    # log N(z; mean, std) summed over M:
    #   -0.5 * sum(((z - mean)/std)^2) - sum(log std) - 0.5*M*log(2*pi)
    # constant terms are hoisted into c (scalar) in the wrapper.
    normed = (z - mean) * inv_std
    logp_ref[...] = (-0.5) * jnp.sum(normed * normed, axis=-1, keepdims=True) \
        + c_ref[...]

    # Reparameterized sample from the prior (== eps for the untrained 0/1 params).
    sample_ref[...] = (mean + std * eps).astype(sample_ref.dtype)


def _pick_batch_tile(B, M, bytes_per_elem=4, vmem_budget=8 * 1024 * 1024):
    """Rows per batch tile: big enough to amortize ~0.35us/step pipeline
    overhead, small enough that double-buffered z/eps/sample tiles stay well
    inside the scoped VMEM budget on every generation (v7x: 64 MiB physical)."""
    per_row = 3 * 2 * M * bytes_per_elem      # z + eps + sample, double-buffered
    tb = vmem_budget // max(per_row, 1)
    tb = int(max(8, min(2048, tb)))
    tb -= tb % 8                              # sublane-aligned tile
    if B <= tb:
        return B                              # one block = full batch (always legal)
    return tb


def gaussian_prior(z, mean, std, eps):
    """z [B, M], mean/std [M], eps [B, M] -> (log_prob [B] f32, sample [B, M])."""
    B, M = z.shape
    f32 = jnp.float32

    # Tiny [M]-length precompute (hoisted out of the [B, M] hot path).
    mean2d = mean.reshape(1, M).astype(f32)
    std2d = std.reshape(1, M).astype(f32)
    inv_std2d = 1.0 / std2d                                  # exact reciprocal
    c = (-(jnp.sum(jnp.log(std2d)) + 0.5 * M * _LOG_2PI)).reshape(1, 1).astype(f32)

    tb = _pick_batch_tile(B, M)
    grid = (pl.cdiv(B, tb),)
    sample_dtype = eps.dtype

    logp, sample = pl.pallas_call(
        _gaussian_prior_kernel,
        out_shape=(
            jax.ShapeDtypeStruct((B, 1), f32),
            jax.ShapeDtypeStruct((B, M), sample_dtype),
        ),
        grid=grid,
        in_specs=[
            pl.BlockSpec((tb, M), lambda i: (i, 0)),   # z        (native dtype)
            pl.BlockSpec((1, M), lambda i: (0, 0)),    # mean     (f32)
            pl.BlockSpec((1, M), lambda i: (0, 0)),    # std      (f32)
            pl.BlockSpec((1, M), lambda i: (0, 0)),    # inv_std  (f32)
            pl.BlockSpec((tb, M), lambda i: (i, 0)),   # eps      (native dtype)
            pl.BlockSpec((1, 1), lambda i: (0, 0)),    # c        (f32 scalar)
        ],
        out_specs=(
            pl.BlockSpec((tb, 1), lambda i: (i, 0)),   # logp
            pl.BlockSpec((tb, M), lambda i: (i, 0)),   # sample
        ),
        compiler_params=pltpu.CompilerParams(
            dimension_semantics=("parallel",)),        # shard batch tiles (v7x 2 TCs)
    )(z, mean2d, std2d, inv_std2d, eps, c)

    return logp[:, 0], sample


if __name__ == "__main__":
    M = 32   # latent dimension (GaussianPrior(M))
    B = 8    # batch of latent vectors at which the prior is evaluated

    # Deterministic parameters matching nn.Parameter(torch.zeros(M)) / torch.ones(M)
    mean = jnp.zeros((M,), dtype=jnp.float32)
    std = jnp.ones((M,), dtype=jnp.float32)

    key = jax.random.PRNGKey(0)
    kz, keps = jax.random.split(key)
    z = jax.random.normal(kz, (B, M), dtype=jnp.float32)
    eps = jax.random.normal(keps, (B, M), dtype=jnp.float32)

    logp, sample = gaussian_prior(z, mean, std, eps)
    jax.block_until_ready((logp, sample))

    # Reference check (plain JAX) of Independent(Normal(0,1),1).log_prob(z) / rsample
    ref_logp = jnp.sum(-0.5 * z * z - 0.5 * _LOG_2PI, axis=-1)
    ref_sample = mean[None, :] + std[None, :] * eps
    assert jnp.allclose(logp, ref_logp, atol=1e-5, rtol=1e-5)
    assert jnp.allclose(sample, ref_sample, atol=1e-6)

    print("KERNEL_OK")
</pallas_src>

<mosaic_0001>
module attributes {stable_mosaic.version = 11 : i64} {
  func.func @_gaussian_prior_kernel(%arg0: i32, %arg1: memref<8x32xf32, #tpu.memory_space<vmem>>, %arg2: memref<1x32xf32, #tpu.memory_space<vmem>>, %arg3: memref<1x32xf32, #tpu.memory_space<vmem>>, %arg4: memref<1x32xf32, #tpu.memory_space<vmem>>, %arg5: memref<8x32xf32, #tpu.memory_space<vmem>>, %arg6: memref<1x1xf32, #tpu.memory_space<vmem>>, %arg7: memref<8x1xf32, #tpu.memory_space<vmem>>, %arg8: memref<8x32xf32, #tpu.memory_space<vmem>>) attributes {dimension_semantics = [#tpu.dimension_semantics<parallel>], iteration_bounds = array<i64: 1>, scalar_prefetch = 0 : i64, scratch_operands = 0 : i64, tpu.core_type = #tpu.core_type<tc>, window_params = [{transform_indices = @transform_0, window_bounds = array<i64: 8, 32>}, {pipeline_mode = #tpu.pipeline_mode<synchronous>, transform_indices = @transform_1, window_bounds = array<i64: 1, 32>}, {pipeline_mode = #tpu.pipeline_mode<synchronous>, transform_indices = @transform_2, window_bounds = array<i64: 1, 32>}, {pipeline_mode = #tpu.pipeline_mode<synchronous>, transform_indices = @transform_3, window_bounds = array<i64: 1, 32>}, {transform_indices = @transform_4, window_bounds = array<i64: 8, 32>}, {pipeline_mode = #tpu.pipeline_mode<synchronous>, transform_indices = @transform_5, window_bounds = array<i64: 1, 1>}, {transform_indices = @transform_6, window_bounds = array<i64: 8, 1>}, {transform_indices = @transform_7, window_bounds = array<i64: 8, 32>}]} {
    %c0 = arith.constant 0 : index
    %c0_0 = arith.constant 0 : index
    %0 = vector.load %arg1[%c0, %c0_0] : memref<8x32xf32, #tpu.memory_space<vmem>>, vector<8x32xf32>
    %c0_1 = arith.constant 0 : index
    %c0_2 = arith.constant 0 : index
    %1 = vector.load %arg5[%c0_1, %c0_2] : memref<8x32xf32, #tpu.memory_space<vmem>>, vector<8x32xf32>
    %c0_3 = arith.constant 0 : index
    %c0_4 = arith.constant 0 : index
    %2 = vector.load %arg2[%c0_3, %c0_4] : memref<1x32xf32, #tpu.memory_space<vmem>>, vector<1x32xf32>
    %c0_5 = arith.constant 0 : index
    %c0_6 = arith.constant 0 : index
    %3 = vector.load %arg3[%c0_5, %c0_6] : memref<1x32xf32, #tpu.memory_space<vmem>>, vector<1x32xf32>
    %c0_7 = arith.constant 0 : index
    %c0_8 = arith.constant 0 : index
    %4 = vector.load %arg4[%c0_7, %c0_8] : memref<1x32xf32, #tpu.memory_space<vmem>>, vector<1x32xf32>
    %5 = vector.broadcast %2 : vector<1x32xf32> to vector<8x32xf32>
    %6 = arith.subf %0, %5 : vector<8x32xf32>
    %7 = vector.broadcast %4 : vector<1x32xf32> to vector<8x32xf32>
    %8 = arith.mulf %6, %7 : vector<8x32xf32>
    %9 = arith.mulf %8, %8 : vector<8x32xf32>
    %cst = arith.constant dense<0.000000e+00> : vector<8xf32>
    %10 = vector.multi_reduction <add>, %9, %cst [1] : vector<8x32xf32> to vector<8xf32>
    %11 = vector.shape_cast %10 : vector<8xf32> to vector<8x1xf32>
    %cst_9 = arith.constant -5.000000e-01 : f32
    %12 = vector.broadcast %cst_9 : f32 to vector<8x1xf32>
    %13 = arith.mulf %12, %11 : vector<8x1xf32>
    %c0_10 = arith.constant 0 : index
    %c0_11 = arith.constant 0 : index
    %14 = vector.load %arg6[%c0_10, %c0_11] : memref<1x1xf32, #tpu.memory_space<vmem>>, vector<1x1xf32>
    %15 = vector.broadcast %14 : vector<1x1xf32> to vector<8x1xf32>
    %16 = arith.addf %13, %15 : vector<8x1xf32>
    %c0_12 = arith.constant 0 : index
    %c0_13 = arith.constant 0 : index
    %17 = vector.load %arg7[%c0_12, %c0_13] : memref<8x1xf32, #tpu.memory_space<vmem>>, vector<8x1xf32>
    tpu.vector_store %arg7[%c0_12, %c0_13], %16 {strides = array<i32>} : memref<8x1xf32, #tpu.memory_space<vmem>>, vector<8x1xf32>,
    %18 = vector.broadcast %3 : vector<1x32xf32> to vector<8x32xf32>
    %19 = arith.mulf %18, %1 : vector<8x32xf32>
    %20 = vector.broadcast %2 : vector<1x32xf32> to vector<8x32xf32>
    %21 = arith.addf %20, %19 : vector<8x32xf32>
    %c0_14 = arith.constant 0 : index
    %c0_15 = arith.constant 0 : index
    %22 = vector.load %arg8[%c0_14, %c0_15] : memref<8x32xf32, #tpu.memory_space<vmem>>, vector<8x32xf32>
    tpu.vector_store %arg8[%c0_14, %c0_15], %21 {strides = array<i32>} : memref<8x32xf32, #tpu.memory_space<vmem>>, vector<8x32xf32>,
    return
  }
  func.func @transform_0(%arg0: i32) -> (i32, i32) {
    %c0_i32 = arith.constant 0 : i32
    %c0_i32_0 = arith.constant 0 : i32
    return %arg0, %c0_i32 : i32, i32
  }
  func.func @transform_1(%arg0: i32) -> (i32, i32) {
    %c0_i32 = arith.constant 0 : i32
    %c0_i32_0 = arith.constant 0 : i32
    %c0_i32_1 = arith.constant 0 : i32
    return %c0_i32, %c0_i32_0 : i32, i32
  }
  func.func @transform_2(%arg0: i32) -> (i32, i32) {
    %c0_i32 = arith.constant 0 : i32
    %c0_i32_0 = arith.constant 0 : i32
    %c0_i32_1 = arith.constant 0 : i32
    return %c0_i32, %c0_i32_0 : i32, i32
  }
  func.func @transform_3(%arg0: i32) -> (i32, i32) {
    %c0_i32 = arith.constant 0 : i32
    %c0_i32_0 = arith.constant 0 : i32
    %c0_i32_1 = arith.constant 0 : i32
    return %c0_i32, %c0_i32_0 : i32, i32
  }
  func.func @transform_4(%arg0: i32) -> (i32, i32) {
    %c0_i32 = arith.constant 0 : i32
    %c0_i32_0 = arith.constant 0 : i32
    return %arg0, %c0_i32 : i32, i32
  }
  func.func @transform_5(%arg0: i32) -> (i32, i32) {
    %c0_i32 = arith.constant 0 : i32
    %c0_i32_0 = arith.constant 0 : i32
    %c0_i32_1 = arith.constant 0 : i32
    return %c0_i32, %c0_i32_0 : i32, i32
  }
  func.func @transform_6(%arg0: i32) -> (i32, i32) {
    %c0_i32 = arith.constant 0 : i32
    %c0_i32_0 = arith.constant 0 : i32
    return %arg0, %c0_i32 : i32, i32
  }
  func.func @transform_7(%arg0: i32) -> (i32, i32) {
    %c0_i32 = arith.constant 0 : i32
    %c0_i32_0 = arith.constant 0 : i32
    return %arg0, %c0_i32 : i32, i32
  }
}

</mosaic_0001>

<llo_original>
// kernel: tpu_custom_call.1
$region0: #{tpu_custom_call.1}
  #allocation0 [shape = 'u32[]', space=smem, size = 0x4, offset = 0x4, fixed_abs, tag = 'smem constant byte address 0x4 - core index']
  #allocation1 [shape = 'u32[72,128]{1,0:T(1,128)}', space=vmem, size = 0x9000, scoped, tag = 'internal scratch']
  #allocation2 [shape = 'f32[1,1]{1,0:T(1,128)S(1)}', space=vmem, size = 0x200, scoped, tag = 'scoped memory for tpu_custom_call.1']
  %s0 = inlined_call_operand.hbm [shape: f32[8,32], index: 0, kind: input, shape index: {}]
  %s1 = inlined_call_operand.vmem [shape: f32[1,32], index: 1, kind: input, shape index: {}]
  %s2 = inlined_call_operand.vmem [shape: f32[1,32], index: 2, kind: input, shape index: {}]
  %s3 = inlined_call_operand.vmem [shape: f32[1,32], index: 3, kind: input, shape index: {}]
  %s4 = inlined_call_operand.hbm [shape: f32[8,32], index: 4, kind: input, shape index: {}]
  %s5 = inlined_call_operand.<no memory space> [shape: f32[1,1], index: 5, kind: input, shape index: {}]
  %s6 = inlined_call_operand.vmem [shape: f32[8,1], index: 6, kind: output, shape index: {0}]
  %s7 = inlined_call_operand.hbm [shape: f32[8,32], index: 7, kind: output, shape index: {1}]
  %8 = xla_tuple %s6, %s7
  %s9 = sld [smem:[#allocation0]]
  $region50: #{tpu_custom_call.1} parent=0
    _
  %s11 = ssub.s32 1, %s9
  %s12 = scalar_select 0, %s11, %s9
  %v13 = vstv %s5
  %14 = vst [vmem:[#allocation2] sm:$0x1] %v13
  $region1: #{tpu_custom_call.1} parent=0
    #allocation3 [shape = 'u8[4096]{0}', space=vmem, size = 0x1000, scoped, tag = 'input window, operand 0, single buffered']
    #allocation4 [shape = 's32[1]{0}', space=sflag, size = 0x4, scoped, tag = 'scoped memory for tpu_custom_call.1']
    #allocation5 [shape = 's32[1]{0}', space=sflag, size = 0x4, scoped, tag = 'scoped memory for tpu_custom_call.1']
    #allocation6 [shape = 'u8[4096]{0}', space=vmem, size = 0x1000, scoped, tag = 'input window, operand 4, single buffered']
    #allocation7 [shape = 's32[1]{0}', space=sflag, size = 0x4, scoped, tag = 'scoped memory for tpu_custom_call.1']
    #allocation8 [shape = 'u8[4096]{0}', space=vmem, size = 0x1000, scoped, tag = 'output window, operand 1, single buffered']
    %15 = vsyncpa [#allocation4], 0
    %16 = vsyncpa [#allocation7], 0
    %17 = vsyncpa [#allocation5], 0
    // Predicated region
    $region2: #{tpu_custom_call.1} parent=1 // pred_check
      _
    $region3: #{tpu_custom_call.1} parent=1 // pred_check_branch
      %19 = sbr.rel (0) target = $region5
    $region4: #{tpu_custom_call.1} parent=1 // pred_region
      %21 = vsyncadd [#allocation4], 0
      %s23 = sshll.u32 %s0, 4
      %s24 = int_to_ptr.hbm [resolvable:$true] %s23
      %s25 = sshll.u32 [#allocation3], 4
      %s26 = int_to_ptr.vmem [resolvable:$true] %s25
      %28 = dma.hbm_to_vmem [thread:$0]  %s24, 128, %s26, [#allocation4]
    $region5: #{tpu_custom_call.1} parent=1 // pred_fallthru
      _
    // Predicated region
    $region6: #{tpu_custom_call.1} parent=1 // pred_check
      _
    $region7: #{tpu_custom_call.1} parent=1 // pred_check_branch
      %30 = sbr.rel (0) target = $region9
    $region8: #{tpu_custom_call.1} parent=1 // pred_region
      _
    $region9: #{tpu_custom_call.1} parent=1 // pred_fallthru
      _
    // Predicated region
    $region10: #{tpu_custom_call.1} parent=1 // pred_check
      _
    $region11: #{tpu_custom_call.1} parent=1 // pred_check_branch
      %32 = sbr.rel (0) target = $region13
    $region12: #{tpu_custom_call.1} parent=1 // pred_region
      _
    $region13: #{tpu_custom_call.1} parent=1 // pred_fallthru
      _
    // Predicated region
    $region14: #{tpu_custom_call.1} parent=1 // pred_check
      _
    $region15: #{tpu_custom_call.1} parent=1 // pred_check_branch
      %34 = sbr.rel (0) target = $region17
    $region16: #{tpu_custom_call.1} parent=1 // pred_region
      _
    $region17: #{tpu_custom_call.1} parent=1 // pred_fallthru
      _
    // Predicated region
    $region18: #{tpu_custom_call.1} parent=1 // pred_check
      _
    $region19: #{tpu_custom_call.1} parent=1 // pred_check_branch
      %36 = sbr.rel (0) target = $region21
    $region20: #{tpu_custom_call.1} parent=1 // pred_region
      %38 = vsyncadd [#allocation7], 0
      %s40 = sshll.u32 %s4, 4
      %s41 = int_to_ptr.hbm [resolvable:$true] %s40
      %s42 = sshll.u32 [#allocation6], 4
      %s43 = int_to_ptr.vmem [resolvable:$true] %s42
      %45 = dma.hbm_to_vmem [thread:$0]  %s41, 128, %s43, [#allocation7]
    $region21: #{tpu_custom_call.1} parent=1 // pred_fallthru
      _
    // Predicated region
    $region22: #{tpu_custom_call.1} parent=1 // pred_check
      _
    $region23: #{tpu_custom_call.1} parent=1 // pred_check_branch
      %47 = sbr.rel (0) target = $region25
    $region24: #{tpu_custom_call.1} parent=1 // pred_region
      _
    $region25: #{tpu_custom_call.1} parent=1 // pred_fallthru
      _
    // Predicated region
    $region26: #{tpu_custom_call.1} parent=1 // pred_check
      _
    $region27: #{tpu_custom_call.1} parent=1 // pred_check_branch
      %49 = sbr.rel (0) target = $region29
    $region28: #{tpu_custom_call.1} parent=1 // pred_region
      %51 = dma.done [#allocation4], 128
    $region29: #{tpu_custom_call.1} parent=1 // pred_fallthru
      _
    // Predicated region
    $region30: #{tpu_custom_call.1} parent=1 // pred_check
      _
    $region31: #{tpu_custom_call.1} parent=1 // pred_check_branch
      %53 = sbr.rel (0) target = $region33
    $region32: #{tpu_custom_call.1} parent=1 // pred_region
      %55 = dma.done [#allocation7], 128
    $region33: #{tpu_custom_call.1} parent=1 // pred_fallthru
      _
    %v56 = vld [vmem:[#allocation3] sm:$0xff]
    %v57 = vld [vmem:[#allocation6] sm:$0xff]
    %v58 = vld [vmem:[%s1] sm:$0x1]
    %v59 = vld [vmem:[%s2] sm:$0x1]
    %v60 = vld [vmem:[%s3] sm:$0x1]
    %v62 = vperm.slane %v58, 0
    %v64 = vsub.f32 %v56, %v62
    %v66 = vperm.slane %v60, 0
    %v68 = vmul.f32 %v64, %v66
    %v69 = vmul.f32 %v68, %v68
    %vm70 = vcmask 261120
    %v71 = vsel %vm70, %v69, 0.0
    %72 = vadd.xlane.f32.xlu0 %v71
    %v73 = vpop.xlane.xlu0 %72
    %v74 = vmul.f32 %v73, -0.5
    %v75 = vld [vmem:[#allocation2] sm:$0x1]
    %v77 = vperm.slane %v75, 0
    %v79 = vadd.f32 %v74, %v77
    %vm80 = vcmask 7168
    %81 = vst.msk [vmem:[%s6] sm:$0xff] %vm80, %v79
    %v83 = vperm.slane %v59, 0
    %v85 = vmul.f32 %v83, %v57
    %v86 = vadd.f32 %v62, %v85
    %87 = vst.msk [vmem:[#allocation8] sm:$0xff] %vm70, %v86
    // Predicated region
    $region34: #{tpu_custom_call.1} parent=1 // pred_check
      _
    $region35: #{tpu_custom_call.1} parent=1 // pred_check_branch
      %89 = sbr.rel (0) target = $region37
    $region36: #{tpu_custom_call.1} parent=1 // pred_region
      _
    $region37: #{tpu_custom_call.1} parent=1 // pred_fallthru
      _
    // Predicated region
    $region38: #{tpu_custom_call.1} parent=1 // pred_check
      _
    $region39: #{tpu_custom_call.1} parent=1 // pred_check_branch
      %91 = sbr.rel (0) target = $region41
    $region40: #{tpu_custom_call.1} parent=1 // pred_region
      %93 = vsyncadd [#allocation5], 0
      %s95 = sshll.u32 [#allocation8], 4
      %s96 = int_to_ptr.vmem [resolvable:$true] %s95
      %s97 = sshll.u32 %s7, 4
      %s98 = int_to_ptr.hbm [resolvable:$true] %s97
      %100 = dma.vmem_to_hbm [thread:$0]  %s96, 128, %s98, [#allocation5]
    $region41: #{tpu_custom_call.1} parent=1 // pred_fallthru
      _
    // Predicated region
    $region42: #{tpu_custom_call.1} parent=1 // pred_check
      _
    $region43: #{tpu_custom_call.1} parent=1 // pred_check_branch
      %102 = sbr.rel (0) target = $region45
    $region44: #{tpu_custom_call.1} parent=1 // pred_region
      _
    $region45: #{tpu_custom_call.1} parent=1 // pred_fallthru
      _
    // Predicated region
    $region46: #{tpu_custom_call.1} parent=1 // pred_check
      _
    $region47: #{tpu_custom_call.1} parent=1 // pred_check_branch
      %104 = sbr.rel (0) target = $region49
    $region48: #{tpu_custom_call.1} parent=1 // pred_region
      %106 = dma.done [#allocation5], 128
    $region49: #{tpu_custom_call.1} parent=1 // pred_fallthru
      _
    %107 = vsyncpa [#allocation4], 1
    %108 = vsyncpa [#allocation7], 1
    %109 = vsyncpa [#allocation5], 1

</llo_original>
